<compile_context>
chip_gen: v5e
topology: v5e:2x2
jax: 0.10.0
libtpu: 0.0.40
codegen_flags: <defaults>
</compile_context>

<pallas_src>
import math

import jax
import jax.numpy as jnp
from jax.experimental import pallas as pl
from jax.experimental.pallas import tpu as pltpu


def _identity_kernel(x_ref, o_ref):
    # Identity pass-through of the current lane-dense tile.
    o_ref[...] = x_ref[...]


_LANE_CANDIDATES = (8192, 4096, 2048, 1024, 512, 256, 128)
_SUPPORTED_ITEMSIZES = (1, 2, 4)


def _device_tuning():
    """Return (target_block_bytes, vmem_limit_bytes) tuned per TPU generation."""
    try:
        kind = jax.devices()[0].device_kind.lower()
    except Exception:
        kind = ""
    if "v5 lite" in kind or "v5e" in kind or "v5litepod" in kind:
        # v5e scoped-VMEM default is 16 MiB: 2 in + 2 out @ 2 MiB = 8 MiB, safe.
        return 2 << 20, None
    if "v6" in kind:
        # 16 MiB pipelined footprint, under the 32 MiB scoped default.
        return 4 << 20, None
    if "7" in kind:
        # ~24 MiB footprint needs the scoped limit raised; 64 MiB physical VMEM.
        return 6 << 20, 40 << 20
    # Unknown part: conservative.
    return 2 << 20, None


def identity_transform(value: jax.Array, emb_dim: int, *, use_kernel: bool = False) -> jax.Array:
    """Equivalent of IdentityTransform(emb_dim).forward(value): value.view(-1, emb_dim)."""
    total = math.prod(value.shape)
    assert total % emb_dim == 0, "input size must be divisible by emb_dim"
    rows = total // emb_dim

    # --- Fast path (default): metadata-only view, zero HBM traffic. ---------
    if not use_kernel:
        return value.reshape(rows, emb_dim)

    itemsize = jnp.dtype(value.dtype).itemsize
    if itemsize not in _SUPPORTED_ITEMSIZES:
        # Sub-byte / wide dtypes: sublane packing rules differ; don't kernelize.
        return value.reshape(rows, emb_dim)

    # --- 1) lane-dense slab: widest lane width (multiple of 128) dividing total.
    lane = next((c for c in _LANE_CANDIDATES if total % c == 0), None)
    if lane is None:
        # A <128 lane dim would force masked vst.msk partial stores (~4.5x
        # slower wall-compute); fall back to the pure reshape instead.
        return value.reshape(rows, emb_dim)

    slab_rows = total // lane
    x = value.reshape(slab_rows, lane)  # metadata glue

    # --- 2) per-generation row tiles, multiple of the dtype's sublane packing.
    target_block_bytes, vmem_limit = _device_tuning()
    sub_mult = max(8, 32 // itemsize)   # 8 f32 / 16 bf16 / 32 int8
    if slab_rows <= sub_mult:
        block_rows = slab_rows          # full-extent block: always legal
    else:
        block_rows = max(sub_mult, target_block_bytes // (lane * itemsize))
        block_rows = (block_rows // sub_mult) * sub_mult
        block_rows = min(block_rows, (slab_rows // sub_mult) * sub_mult)
        # Guarantee >=2 grid steps so both v7x TensorCores participate.
        if pl.cdiv(slab_rows, block_rows) < 2 and block_rows > sub_mult:
            block_rows = max(sub_mult, ((block_rows // 2) // sub_mult) * sub_mult)

    grid = (pl.cdiv(slab_rows, block_rows),)

    call = pl.pallas_call(
        _identity_kernel,
        out_shape=jax.ShapeDtypeStruct((slab_rows, lane), x.dtype),
        grid_spec=pltpu.PrefetchScalarGridSpec(
            num_scalar_prefetch=0,
            grid=grid,
            in_specs=[pl.BlockSpec((block_rows, lane), lambda i: (i, 0))],
            out_specs=pl.BlockSpec((block_rows, lane), lambda i: (i, 0)),
        ),
        input_output_aliases={0: 0},  # reuse the input HBM buffer for the output
        cost_estimate=pl.CostEstimate(
            flops=0, transcendentals=0, bytes_accessed=2 * total * itemsize),
        compiler_params=pltpu.CompilerParams(
            dimension_semantics=("parallel",),
            vmem_limit_bytes=vmem_limit,
        ),
    )

    # jit + donation so the alias is honored (no defensive copy of the input).
    out = jax.jit(call, donate_argnums=0)(x)

    # Glue: metadata-only reshape back to the semantic 2-D view.
    return out.reshape(rows, emb_dim)


if __name__ == "__main__":
    key = jax.random.PRNGKey(0)
    # Small shapes consistent with the module: (batch, seq, emb_dim) embeddings
    # flattened to (-1, emb_dim).
    batch, seq, emb_dim = 2, 8, 32
    value = jax.random.normal(key, (batch, seq, emb_dim), dtype=jnp.float32)

    # Reference semantics: value.view(-1, emb_dim). Materialize on host before
    # running the (donating, aliased) kernel so the check cannot be disturbed.
    ref = jax.device_get(value.reshape(-1, emb_dim))

    # Default fast path (pure metadata reshape).
    out_fast = jax.block_until_ready(identity_transform(value, emb_dim))
    assert out_fast.shape == (batch * seq, emb_dim), out_fast.shape
    assert out_fast.dtype == value.dtype
    assert jnp.array_equal(out_fast, jnp.asarray(ref))

    # Opt-in Pallas kernel path (lane-dense identity copy).
    out_kernel = jax.block_until_ready(identity_transform(value, emb_dim, use_kernel=True))
    assert out_kernel.shape == (batch * seq, emb_dim), out_kernel.shape
    assert out_kernel.dtype == value.dtype
    assert jnp.array_equal(out_kernel, jnp.asarray(ref))

    print("KERNEL_OK")
</pallas_src>

<mosaic_0001>
module attributes {stable_mosaic.version = 11 : i64} {
  func.func @_identity_kernel(%arg0: i32, %arg1: memref<1x512xf32, #tpu.memory_space<vmem>>, %arg2: memref<1x512xf32, #tpu.memory_space<vmem>>) attributes {dimension_semantics = [#tpu.dimension_semantics<parallel>], iteration_bounds = array<i64: 1>, scalar_prefetch = 0 : i64, scratch_operands = 0 : i64, tpu.core_type = #tpu.core_type<tc>, window_params = [{transform_indices = @transform_0, window_bounds = array<i64: 1, 512>}, {transform_indices = @transform_1, window_bounds = array<i64: 1, 512>}]} {
    %c0 = arith.constant 0 : index
    %c0_0 = arith.constant 0 : index
    %0 = vector.load %arg1[%c0, %c0_0] : memref<1x512xf32, #tpu.memory_space<vmem>>, vector<1x512xf32>
    %c0_1 = arith.constant 0 : index
    %c0_2 = arith.constant 0 : index
    %1 = vector.load %arg2[%c0_1, %c0_2] : memref<1x512xf32, #tpu.memory_space<vmem>>, vector<1x512xf32>
    tpu.vector_store %arg2[%c0_1, %c0_2], %0 {strides = array<i32>} : memref<1x512xf32, #tpu.memory_space<vmem>>, vector<1x512xf32>,
    return
  }
  func.func @transform_0(%arg0: i32) -> (i32, i32) {
    %c0_i32 = arith.constant 0 : i32
    %c0_i32_0 = arith.constant 0 : i32
    return %arg0, %c0_i32 : i32, i32
  }
  func.func @transform_1(%arg0: i32) -> (i32, i32) {
    %c0_i32 = arith.constant 0 : i32
    %c0_i32_0 = arith.constant 0 : i32
    return %arg0, %c0_i32 : i32, i32
  }
}

</mosaic_0001>

<llo_original>
// kernel: tpu_custom_call.1
$region0: #{tpu_custom_call.1}
  #allocation0 [shape = 'u32[]', space=smem, size = 0x4, offset = 0x4, fixed_abs, tag = 'smem constant byte address 0x4 - core index']
  #allocation1 [shape = 'u32[72,128]{1,0:T(1,128)}', space=vmem, size = 0x9000, scoped, tag = 'internal scratch']
  %s0 = inlined_call_operand.hbm [shape: f32[1,512], index: 0, kind: input, shape index: {}, may-alias: {0,1}]
  %s1 = inlined_call_operand.hbm [shape: f32[1,512], index: 1, kind: output, shape index: {}, may-alias: {0,1}]
  %s2 = sld [smem:[#allocation0]]
  $region18: #{tpu_custom_call.1} parent=0
    _
  %s4 = ssub.s32 1, %s2
  %s5 = scalar_select 0, %s4, %s2
  $region1: #{tpu_custom_call.1} parent=0
    #allocation2 [shape = 'u8[2048]{0}', space=vmem, size = 0x800, scoped, tag = 'input window, operand 0, single buffered']
    #allocation3 [shape = 's32[1]{0}', space=sflag, size = 0x4, scoped, tag = 'scoped memory for tpu_custom_call.1']
    #allocation4 [shape = 's32[1]{0}', space=sflag, size = 0x4, scoped, tag = 'scoped memory for tpu_custom_call.1']
    #allocation5 [shape = 'u8[2048]{0}', space=vmem, size = 0x800, scoped, tag = 'output window, operand 0, single buffered']
    %6 = vsyncpa [#allocation3], 0
    %7 = vsyncpa [#allocation4], 0
    // Predicated region
    $region2: #{tpu_custom_call.1} parent=1 // pred_check
      _
    $region3: #{tpu_custom_call.1} parent=1 // pred_check_branch
      %9 = sbr.rel (0) target = $region5
    $region4: #{tpu_custom_call.1} parent=1 // pred_region
      %11 = vsyncadd [#allocation3], 0
      %s13 = sshll.u32 %s0, 4
      %s14 = int_to_ptr.hbm [resolvable:$true] %s13
      %s15 = sshll.u32 [#allocation2], 4
      %s16 = int_to_ptr.vmem [resolvable:$true] %s15
      %18 = dma.hbm_to_vmem [thread:$0]  %s14, 64, %s16, [#allocation3]
    $region5: #{tpu_custom_call.1} parent=1 // pred_fallthru
      _
    // Predicated region
    $region6: #{tpu_custom_call.1} parent=1 // pred_check
      _
    $region7: #{tpu_custom_call.1} parent=1 // pred_check_branch
      %20 = sbr.rel (0) target = $region9
    $region8: #{tpu_custom_call.1} parent=1 // pred_region
      %22 = dma.done [#allocation3], 64
    $region9: #{tpu_custom_call.1} parent=1 // pred_fallthru
      _
    %v23 = vld [vmem:[#allocation2] sm:$0xf]
    %v24 = vlaneseq
    %vm25 = vcmp.ge.s32.totalorder %v24, 0
    %vm26 = vcmp.lt.s32.totalorder %v24, 512
    %vm27 = vmand %vm25, %vm26
    %28 = vst.msk [vmem:[#allocation5] sm:$0xf] %vm27, %v23
    // Predicated region
    $region10: #{tpu_custom_call.1} parent=1 // pred_check
      _
    $region11: #{tpu_custom_call.1} parent=1 // pred_check_branch
      %30 = sbr.rel (0) target = $region13
    $region12: #{tpu_custom_call.1} parent=1 // pred_region
      %32 = vsyncadd [#allocation4], 0
      %s34 = sshll.u32 [#allocation5], 4
      %s35 = int_to_ptr.vmem [resolvable:$true] %s34
      %s36 = sshll.u32 %s1, 4
      %s37 = int_to_ptr.hbm [resolvable:$true] %s36
      %39 = dma.vmem_to_hbm [thread:$0]  %s35, 64, %s37, [#allocation4]
    $region13: #{tpu_custom_call.1} parent=1 // pred_fallthru
      _
    // Predicated region
    $region14: #{tpu_custom_call.1} parent=1 // pred_check
      _
    $region15: #{tpu_custom_call.1} parent=1 // pred_check_branch
      %41 = sbr.rel (0) target = $region17
    $region16: #{tpu_custom_call.1} parent=1 // pred_region
      %43 = dma.done [#allocation4], 64
    $region17: #{tpu_custom_call.1} parent=1 // pred_fallthru
      _
    %44 = vsyncpa [#allocation3], 1
    %45 = vsyncpa [#allocation4], 1

</llo_original>
